<compile_context>
chip_gen: v7x
topology: tpu7x:2x2x1
jax: 0.10.0
libtpu: 0.0.40
codegen_flags: <defaults>
</compile_context>

<pallas_src>
import math
import numpy as np

import jax
import jax.numpy as jnp
from jax import lax
from jax.experimental import pallas as pl
from jax.experimental.pallas import tpu as pltpu

# ----------------------------- hyper-parameters ------------------------------
SEQ = 8            # sequence length (axis 0 of the module input)
BATCH = 2          # batch size     (axis 1 of the module input)
N_STATE = 32       # n_state
N_HEAD = 4
HEAD_DIM = N_STATE // N_HEAD        # 8
WINDOW_SIZE = 8    # >= SEQ  -> single sliding window (only well-defined config)
MAX_SPAN = 50      # HybridAttention default
MAX_REL_DIST = 1   # HybridAttention default
BASE = 10000       # HybridAttention default
LOCAL_MAX_SPAN = MAX_REL_DIST       # = 1   (positional-arg swap)
LOCAL_BASE = MAX_SPAN               # = 50  (positional-arg swap)
GLOBAL_BASE = BASE                  # = 10000
LN_EPS = 1e-5
SB = SEQ * BATCH                    # fused row count (16)
NEG = -1e9                          # additive-mask sentinel (safe in f32)

assert WINDOW_SIZE >= SEQ, "sliding-window fast path requires a single window"
assert int(LOCAL_MAX_SPAN * 1.0) == 1, "local-branch shortcut requires adaptive span == 1"
assert N_STATE % N_HEAD == 0 and HEAD_DIM % 2 == 0

# --------------------------- single-slab layout -------------------------------
D = N_STATE
LANES = 6 * D                       # 192 lanes
OFF_WF = 0                          # rows [0, D)        fused RHS [wq1|wk1|wq2|wk2|wv|wloc]
OFF_WGO = D                         # rows [D, 2D)       wo_g @ wp[D:]   in lanes [0, D)
OFF_SEL = 2 * D                     # rows [2D, 2D+SB)   local-row selector in lanes [0, SB)
OFF_TRIG = 2 * D + SB               # rows (+SB)         [cos|cos|sin|sin] in lanes [0, 4D)
OFF_MASK = 2 * D + 2 * SB           # rows (+SB)         block-causal additive mask, lanes [0, SB)
OFF_BIAS = 2 * D + 3 * SB           # 1 row              fused projection bias, lanes [0, 6D)
OFF_BALL = OFF_BIAS + 1             # 1 row              folded constant output bias, lanes [0, D)
SLAB_ROWS = OFF_BALL + 1            # 114


# --------------------------------- kernel ------------------------------------
def hybrid_attention_kernel(x_ref, w_ref, out_ref):
    """Single invocation over all SEQ*BATCH rows (flat row r = s*BATCH + b)."""
    f32, bf16 = jnp.float32, jnp.bfloat16
    x = x_ref[...]                                        # (SB, D) f32

    # Shared LayerNorm core: gammas/betas of BOTH LayerNorms are folded host-side
    # into the projection weights / bias rows, so only the parameter-free
    # normalization is computed (once instead of two full LayerNorms).
    mu = jnp.mean(x, axis=-1, keepdims=True)
    var = jnp.mean(jnp.square(x - mu), axis=-1, keepdims=True)
    xhat = (x - mu) * lax.rsqrt(var + LN_EPS)             # (SB, D) f32

    # One lane-packed projection for q1|k1|q2|k2|v|local: single bf16 MXU pass on
    # v6e/v7x (two on v5e) instead of six narrow 32-lane matmuls.
    w_fused = w_ref[OFF_WF:OFF_WF + D, :].astype(bf16)    # (D, 6D)
    proj = jnp.dot(xhat.astype(bf16), w_fused,
                   preferred_element_type=f32)            # (SB, 6D) f32 accum
    proj = proj + w_ref[OFF_BIAS:OFF_BIAS + 1, :]         # fused bias row (f32)

    # Rotary combine (rotation matrix / RoPE / positional_scaling / sdpa scale all
    # pre-folded): [qr|kr] = [q1|k1]*cos + [q2|k2]*sin, one 64-lane VPU pass.
    cos2 = w_ref[OFF_TRIG:OFF_TRIG + SB, 0:2 * D]         # (SB, 2D) = [cos|cos]
    sin2 = w_ref[OFF_TRIG:OFF_TRIG + SB, 2 * D:4 * D]     # (SB, 2D) = [sin|sin]
    qk = proj[:, 0:2 * D] * cos2 + proj[:, 2 * D:4 * D] * sin2
    qr = qk[:, 0:D]                                       # scale*ps*rot(q)
    kr = qk[:, D:2 * D]                                   # ps*rot(k)
    v = proj[:, 4 * D:5 * D]                              # global values
    loc_pre = proj[:, 5 * D:6 * D]                        # LN_l(x) @ (wv_l wo_l wp[:D])

    # Local (AdaptiveSpan, span==1) branch: broadcast the seq-0 row of each batch.
    sel = w_ref[OFF_SEL:OFF_SEL + SB, 0:SB].astype(bf16)  # exact 0/1 selector
    loc = jnp.dot(sel, loc_pre.astype(bf16), preferred_element_type=f32)

    # Global causal attention per head; matmuls bf16, softmax f32.
    mask = w_ref[OFF_MASK:OFF_MASK + SB, 0:SB]            # (SB, SB) additive mask
    qr_b, kr_b, v_b = qr.astype(bf16), kr.astype(bf16), v.astype(bf16)
    o_parts = []
    for h in range(N_HEAD):                               # static unroll over heads
        sl = slice(h * HEAD_DIM, (h + 1) * HEAD_DIM)
        s = lax.dot_general(qr_b[:, sl], kr_b[:, sl], (((1,), (1,)), ((), ())),
                            preferred_element_type=f32) + mask
        s = s - jnp.max(s, axis=-1, keepdims=True)
        p = jnp.exp(s)
        p = p * pl.reciprocal(jnp.sum(p, axis=-1, keepdims=True), approx=True)
        o_parts.append(jnp.dot(p.astype(bf16), v_b[:, sl],
                               preferred_element_type=f32))   # (SB, HEAD_DIM)

    # Fused output projection: one (SB,D)@(D,D) matmul instead of 4 per-head dots.
    o_cat = jnp.concatenate(o_parts, axis=-1).astype(bf16)    # lane concat, 1 vreg wide
    wgo = w_ref[OFF_WGO:OFF_WGO + D, 0:D].astype(bf16)
    glob = jnp.dot(o_cat, wgo, preferred_element_type=f32)

    out_ref[...] = loc + glob + w_ref[OFF_BALL:OFF_BALL + 1, 0:D]


# ------------------------------- wrapper --------------------------------------
def hybrid_attention_forward(x, slab):
    """x: (SEQ, BATCH, N_STATE) float32, PyTorch layout. Returns same shape."""
    x_flat = x.reshape(SB, N_STATE)       # row r = s*BATCH + b (layout-preserving)
    out_flat = pl.pallas_call(
        hybrid_attention_kernel,
        out_shape=jax.ShapeDtypeStruct((SB, N_STATE), jnp.float32),
        in_specs=[pl.BlockSpec(memory_space=pltpu.MemorySpace.VMEM)] * 2,
        out_specs=pl.BlockSpec(memory_space=pltpu.MemorySpace.VMEM),
    )(x_flat, slab)
    # Output kept (SB, 32); a lane-dense relayout would cost as much as it saves here.
    return out_flat.reshape(SEQ, BATCH, N_STATE)


# ------------------------- parameter construction -----------------------------
def make_rotary_params(key):
    num_rot = HEAD_DIM // 2
    return {
        "thetas": jnp.zeros((num_rot,), jnp.float32),              # __init__: zeros
        "theta_scale": jnp.ones((1,), jnp.float32),                # __init__: ones
        "rotation_pairs": jax.random.uniform(key, (num_rot, 2), jnp.float32) * HEAD_DIM,
        "rotation_matrix": jnp.eye(HEAD_DIM, dtype=jnp.float32),   # __init__: eye
        "num_rotations_scale": jnp.ones((1,), jnp.float32),        # __init__: ones
    }


def make_params(key):
    keys = iter(jax.random.split(key, 32))

    def nrm(shape, scale=0.1):
        return scale * jax.random.normal(next(keys), shape, jnp.float32)

    p = {}
    p["ln_l_g"] = 1.0 + nrm((1, D)); p["ln_l_b"] = nrm((1, D))
    p["ln_g_g"] = 1.0 + nrm((1, D)); p["ln_g_b"] = nrm((1, D))
    # Local MultiheadAttention (weights stored pre-transposed: y = x @ W + b)
    p["wq_l"] = nrm((D, D)); p["bq_l"] = nrm((1, D))
    p["wk_l"] = nrm((D, D))
    p["wv_l"] = nrm((D, D)); p["bv_l"] = nrm((1, D))
    p["wo_l"] = nrm((D, D)); p["bo_l"] = nrm((1, D))
    p["ps_l"] = jnp.ones((1, 1), jnp.float32)                      # positional_scaling
    # Global MultiheadAttention
    p["wq_g"] = nrm((D, D)); p["bq_g"] = nrm((1, D))
    p["wk_g"] = nrm((D, D))
    p["wv_g"] = nrm((D, D)); p["bv_g"] = nrm((1, D))
    p["wo_g"] = nrm((D, D)); p["bo_g"] = nrm((1, D))
    p["ps_g"] = jnp.ones((1, 1), jnp.float32)
    # CombinedRotaryEmbedding parameters (per attention module)
    p["rot_l"] = make_rotary_params(next(keys))
    p["rot_g"] = make_rotary_params(next(keys))
    # Output projection Linear(2*n_state, n_state)
    p["wp"] = nrm((2 * D, D)); p["bp"] = nrm((1, D))
    return p


def build_combined_rotation(rot):
    """Givens product @ rotation_matrix of CombinedRotaryEmbedding (host glue)."""
    thetas = np.asarray(rot["thetas"])
    pairs = np.asarray(rot["rotation_pairs"])
    adjusted = int(thetas.shape[0] * float(rot["num_rotations_scale"][0]))
    R = np.eye(HEAD_DIM, dtype=np.float32)
    for kk in range(adjusted):
        i, j = int(pairs[kk, 0]), int(pairs[kk, 1])
        th = float(thetas[kk]) * float(rot["theta_scale"][0])
        G = np.eye(HEAD_DIM, dtype=np.float32)
        G[i, i] = math.cos(th); G[i, j] = -math.sin(th)
        G[j, i] = math.sin(th); G[j, j] = math.cos(th)
        R = R @ G
    return (R @ np.asarray(rot["rotation_matrix"], np.float32)).astype(np.float32)


def inv_freq_for(base):
    return (1.0 / (float(base) ** (np.arange(0, HEAD_DIM, 2, dtype=np.float32)
                                   / HEAD_DIM))).astype(np.float32)


def rotary_tables_np(R, inv_freq, seq_len):
    """Fold rotation_matrix + interleaved RoPE (concat output layout) into
       rot(x) = (x @ E1) * cosF + (x @ E2) * sinF on the flattened head dim."""
    h, half = HEAD_DIM, HEAD_DIM // 2
    P1 = np.zeros((h, h), np.float32)   # deinterleave: [even | odd]
    P2 = np.zeros((h, h), np.float32)   # deinterleave + swap halves: [odd | even]
    for p in range(half):
        P1[2 * p, p] = 1.0
        P1[2 * p + 1, half + p] = 1.0
        P2[2 * p + 1, p] = 1.0
        P2[2 * p, half + p] = 1.0
    E1 = np.kron(np.eye(N_HEAD, dtype=np.float32), R @ P1)
    E2 = np.kron(np.eye(N_HEAD, dtype=np.float32), R @ P2)
    ang = np.arange(seq_len, dtype=np.float32)[:, None] * inv_freq[None, :]
    cos_full = np.concatenate([np.cos(ang), np.cos(ang)], axis=-1)   # (S, h)
    sin_full = np.concatenate([-np.sin(ang), np.sin(ang)], axis=-1)  # (S, h) (signed)
    cosF = np.tile(cos_full, (1, N_HEAD)).astype(np.float32)
    sinF = np.tile(sin_full, (1, N_HEAD)).astype(np.float32)
    return E1, E2, cosF, sinF


def build_folded_constants(params):
    """Host-side folding of LayerNorm affine / rotary / scale / local branch /
       output projection into ONE lane-dense f32 slab."""
    R_g = build_combined_rotation(params["rot_g"])
    E1, E2, cosF, sinF = rotary_tables_np(R_g, inv_freq_for(GLOBAL_BASE), SEQ)
    ps = float(params["ps_g"][0, 0])
    scale = 1.0 / math.sqrt(HEAD_DIM)                    # sdpa default scale

    g_g = np.asarray(params["ln_g_g"]).reshape(D)
    b_g = np.asarray(params["ln_g_b"]).reshape(1, D)
    g_l = np.asarray(params["ln_l_g"]).reshape(D)
    b_l = np.asarray(params["ln_l_b"]).reshape(1, D)

    wq = np.asarray(params["wq_g"]); bq = np.asarray(params["bq_g"])
    wk = np.asarray(params["wk_g"])
    wv_g = np.asarray(params["wv_g"]); bv_g = np.asarray(params["bv_g"])
    wo_g = np.asarray(params["wo_g"]); bo_g = np.asarray(params["bo_g"])
    wv_l = np.asarray(params["wv_l"]); bv_l = np.asarray(params["bv_l"])
    wo_l = np.asarray(params["wo_l"]); bo_l = np.asarray(params["bo_l"])
    wp = np.asarray(params["wp"]); bp = np.asarray(params["bp"])
    wp_l, wp_g = wp[:D, :], wp[D:, :]

    wq1 = (wq @ E1) * scale; wq2 = (wq @ E2) * scale     # scale folded into q path only
    bq1 = (bq @ E1) * scale; bq2 = (bq @ E2) * scale
    wk1 = wk @ E1; wk2 = wk @ E2
    wgo = wo_g @ wp_g                                    # global out-proj folded with wp
    wloc = wv_l @ wo_l @ wp_l                            # whole local branch folded

    # LayerNorm gamma/beta folding (exact):  ln(x) @ W + b  ==  xhat @ (g⊙W) + (b_ln @ W + b)
    gg, gl = g_g[:, None], g_l[:, None]
    w_fused = np.concatenate(
        [gg * wq1, gg * wk1, gg * wq2, gg * wk2, gg * wv_g, gl * wloc], axis=1)  # (D, 6D)
    b_fused = np.concatenate(
        [bq1 + b_g @ wq1, b_g @ wk1, bq2 + b_g @ wq2, b_g @ wk2,
         bv_g + b_g @ wv_g, np.zeros((1, D), np.float32)], axis=1)               # (1, 6D)
    b_all = (bv_l @ wo_l + bo_l) @ wp_l + bo_g @ wp_g + bp + b_l @ wloc          # (1, D)

    # rotary tables per flat row (r = s*BATCH + b -> seq pos r//BATCH), ps folded
    cos_t = np.repeat(cosF * ps, BATCH, axis=0)          # (SB, D)
    sin_t = np.repeat(sinF * ps, BATCH, axis=0)
    trig = np.concatenate([cos_t, cos_t, sin_t, sin_t], axis=1)                  # (SB, 4D)

    # block-diagonal causal additive mask + local-row selector, flat row order
    r = np.arange(SB)
    s_idx, b_idx = r // BATCH, r % BATCH
    same_batch = b_idx[:, None] == b_idx[None, :]
    causal = s_idx[None, :] <= s_idx[:, None]
    mask = np.where(same_batch & causal, 0.0, NEG).astype(np.float32)            # (SB, SB)
    sel = np.zeros((SB, SB), np.float32)
    sel[r, b_idx] = 1.0                                  # pick seq-0 row of own batch

    slab = np.zeros((SLAB_ROWS, LANES), np.float32)
    slab[OFF_WF:OFF_WF + D, :] = w_fused
    slab[OFF_WGO:OFF_WGO + D, 0:D] = wgo
    slab[OFF_SEL:OFF_SEL + SB, 0:SB] = sel
    slab[OFF_TRIG:OFF_TRIG + SB, 0:4 * D] = trig
    slab[OFF_MASK:OFF_MASK + SB, 0:SB] = mask
    slab[OFF_BIAS, :] = b_fused[0]
    slab[OFF_BALL, 0:D] = b_all[0]
    return jnp.asarray(slab)


# ---------------------- pure-JAX reference (validation) -----------------------
def reference_forward(x, p, R_l, R_g):
    hp = jax.lax.Precision.HIGHEST
    S, B, Dm = x.shape
    NH, HD = N_HEAD, HEAD_DIM

    def layernorm(v, g, b):
        mu = jnp.mean(v, axis=-1, keepdims=True)
        var = jnp.mean(jnp.square(v - mu), axis=-1, keepdims=True)
        return (v - mu) * lax.rsqrt(var + LN_EPS) * g + b

    def rotary(v, R, inv_freq, ps):
        Bv, T, _ = v.shape
        vh = jnp.dot(v.reshape(Bv * T * NH, HD), R, precision=hp)
        vh = vh.reshape(Bv, T, NH, HD)
        ang = jnp.arange(T, dtype=jnp.float32)[:, None] * inv_freq[None, :]
        sin = jnp.sin(ang)[None, :, None, :]
        cos = jnp.cos(ang)[None, :, None, :]
        x1, x2 = vh[..., 0::2], vh[..., 1::2]
        vh = jnp.concatenate([x1 * cos - x2 * sin, x1 * sin + x2 * cos], axis=-1)
        return vh.reshape(Bv, T, Dm) * ps

    def mha(xq, xkv, wq, bq, wk, wv, bv, wo, bo, R, inv_freq, ps, causal):
        q = jnp.dot(xq, wq, precision=hp) + bq
        k = jnp.dot(xkv, wk, precision=hp)
        v = jnp.dot(xkv, wv, precision=hp) + bv
        q = rotary(q, R, inv_freq, ps)
        k = rotary(k, R, inv_freq, ps)
        Bv, T, _ = q.shape
        Tk = k.shape[1]
        qh = q.reshape(Bv, T, NH, HD).transpose(0, 2, 1, 3)
        kh = k.reshape(Bv, Tk, NH, HD).transpose(0, 2, 1, 3)
        vh = v.reshape(Bv, Tk, NH, HD).transpose(0, 2, 1, 3)
        s = jnp.einsum("bnqh,bnkh->bnqk", qh, kh, precision=hp) * (1.0 / math.sqrt(HD))
        if causal:
            msk = jnp.tril(jnp.ones((T, Tk), dtype=bool))
            s = jnp.where(msk, s, -1e30)
        s = s - jnp.max(s, axis=-1, keepdims=True)
        w = jnp.exp(s)
        w = w / jnp.sum(w, axis=-1, keepdims=True)
        o = jnp.einsum("bnqk,bnkh->bnqh", w, vh, precision=hp)
        o = o.transpose(0, 2, 1, 3).reshape(Bv, T, Dm)
        return jnp.dot(o, wo, precision=hp) + bo

    xl = jnp.transpose(layernorm(x, p["ln_l_g"], p["ln_l_b"]), (1, 0, 2))  # (B,S,D)
    xg = jnp.transpose(layernorm(x, p["ln_g_g"], p["ln_g_b"]), (1, 0, 2))

    # local: single sliding window (window_size >= seq), adaptive span == 1
    span = xl[:, :1, :]
    loc = mha(span, span, p["wq_l"], p["bq_l"], p["wk_l"], p["wv_l"], p["bv_l"],
              p["wo_l"], p["bo_l"], R_l, p["inv_freq_l"], p["ps_l"][0, 0],
              causal=False)                                            # (B,1,D)
    local_out = jnp.broadcast_to(loc, (B, S, Dm))

    # global: causal self-attention
    glob = mha(xg, xg, p["wq_g"], p["bq_g"], p["wk_g"], p["wv_g"], p["bv_g"],
               p["wo_g"], p["bo_g"], R_g, p["inv_freq_g"], p["ps_g"][0, 0],
               causal=(S > 1))

    combined = jnp.concatenate([local_out, glob], axis=-1)
    out = jnp.dot(combined, p["wp"], precision=hp) + p["bp"]
    return jnp.transpose(out, (1, 0, 2))


# ---------------------------------- main ---------------------------------------
if __name__ == "__main__":
    key = jax.random.PRNGKey(0)
    kx, kp = jax.random.split(key)
    x = jax.random.normal(kx, (SEQ, BATCH, N_STATE), jnp.float32)

    params = make_params(kp)
    slab = build_folded_constants(params)

    fwd = jax.jit(hybrid_attention_forward)
    out = jax.block_until_ready(fwd(x, slab))
    assert out.shape == (SEQ, BATCH, N_STATE)

    # pure-JAX reference for validation (tolerance widened slightly for bf16 MXU inputs)
    R_l = build_combined_rotation(params["rot_l"])
    R_g = build_combined_rotation(params["rot_g"])
    params["inv_freq_l"] = jnp.asarray(inv_freq_for(LOCAL_BASE))
    params["inv_freq_g"] = jnp.asarray(inv_freq_for(GLOBAL_BASE))
    ref = reference_forward(x, params, jnp.asarray(R_l), jnp.asarray(R_g))
    ref = jax.block_until_ready(ref)
    np.testing.assert_allclose(np.asarray(out), np.asarray(ref),
                               rtol=2.5e-2, atol=2.5e-2)
    print("KERNEL_OK")
</pallas_src>

<mosaic_0001>
module attributes {stable_mosaic.version = 11 : i64} {
  func.func @hybrid_attention_kernel(%arg0: memref<16x32xf32, #tpu.memory_space<vmem>>, %arg1: memref<114x192xf32, #tpu.memory_space<vmem>>, %arg2: memref<16x32xf32, #tpu.memory_space<vmem>>) attributes {dimension_semantics = [], scalar_prefetch = 0 : i64, scratch_operands = 0 : i64, tpu.core_type = #tpu.core_type<tc>} {
    %c0 = arith.constant 0 : index
    %c0_0 = arith.constant 0 : index
    %0 = vector.load %arg0[%c0, %c0_0] : memref<16x32xf32, #tpu.memory_space<vmem>>, vector<16x32xf32>
    %cst = arith.constant dense<0.000000e+00> : vector<16xf32>
    %1 = vector.multi_reduction <add>, %0, %cst [1] : vector<16x32xf32> to vector<16xf32>
    %2 = vector.shape_cast %1 : vector<16xf32> to vector<16x1xf32>
    %cst_1 = arith.constant 3.200000e+01 : f32
    %3 = vector.broadcast %cst_1 : f32 to vector<16x1xf32>
    %4 = arith.divf %2, %3 : vector<16x1xf32>
    %5 = vector.broadcast %4 : vector<16x1xf32> to vector<16x32xf32>
    %6 = arith.subf %0, %5 : vector<16x32xf32>
    %7 = arith.mulf %6, %6 : vector<16x32xf32>
    %cst_2 = arith.constant dense<0.000000e+00> : vector<16xf32>
    %8 = vector.multi_reduction <add>, %7, %cst_2 [1] : vector<16x32xf32> to vector<16xf32>
    %9 = vector.shape_cast %8 : vector<16xf32> to vector<16x1xf32>
    %cst_3 = arith.constant 3.200000e+01 : f32
    %10 = vector.broadcast %cst_3 : f32 to vector<16x1xf32>
    %11 = arith.divf %9, %10 : vector<16x1xf32>
    %12 = vector.broadcast %4 : vector<16x1xf32> to vector<16x32xf32>
    %13 = arith.subf %0, %12 : vector<16x32xf32>
    %cst_4 = arith.constant 9.99999974E-6 : f32
    %14 = vector.broadcast %cst_4 : f32 to vector<16x1xf32>
    %15 = arith.addf %11, %14 : vector<16x1xf32>
    %16 = math.rsqrt %15 : vector<16x1xf32>
    %17 = vector.broadcast %16 : vector<16x1xf32> to vector<16x32xf32>
    %18 = arith.mulf %13, %17 : vector<16x32xf32>
    %c0_5 = arith.constant 0 : index
    %c0_6 = arith.constant 0 : index
    %19 = vector.load %arg1[%c0_5, %c0_6] : memref<114x192xf32, #tpu.memory_space<vmem>>, vector<32x192xf32>
    %20 = arith.truncf %19 : vector<32x192xf32> to vector<32x192xbf16>
    %21 = arith.truncf %18 : vector<16x32xf32> to vector<16x32xbf16>
    %cst_7 = arith.constant dense<0.000000e+00> : vector<16x192xf32>
    %22 = tpu.matmul %21, %20, %cst_7 {dimension_numbers = #tpu.dot_dimension_numbers<[1], [0], [0], [1], [0, 0, 1, 1], [], []>} : vector<16x32xbf16>, vector<32x192xbf16>, vector<16x192xf32> -> vector<16x192xf32>
    %c112 = arith.constant 112 : index
    %c0_8 = arith.constant 0 : index
    %23 = vector.load %arg1[%c112, %c0_8] : memref<114x192xf32, #tpu.memory_space<vmem>>, vector<1x192xf32>
    %24 = vector.broadcast %23 : vector<1x192xf32> to vector<16x192xf32>
    %25 = arith.addf %22, %24 : vector<16x192xf32>
    %c80 = arith.constant 80 : index
    %c0_9 = arith.constant 0 : index
    %26 = vector.load %arg1[%c80, %c0_9] : memref<114x192xf32, #tpu.memory_space<vmem>>, vector<16x64xf32>
    %c80_10 = arith.constant 80 : index
    %c64 = arith.constant 64 : index
    %27 = vector.load %arg1[%c80_10, %c64] : memref<114x192xf32, #tpu.memory_space<vmem>>, vector<16x64xf32>
    %28 = vector.extract_strided_slice %25 {offsets = [0, 0], sizes = [16, 64], strides = [1, 1]} : vector<16x192xf32> to vector<16x64xf32>
    %29 = arith.mulf %28, %26 : vector<16x64xf32>
    %30 = vector.extract_strided_slice %25 {offsets = [0, 64], sizes = [16, 64], strides = [1, 1]} : vector<16x192xf32> to vector<16x64xf32>
    %31 = arith.mulf %30, %27 : vector<16x64xf32>
    %32 = arith.addf %29, %31 : vector<16x64xf32>
    %33 = vector.extract_strided_slice %32 {offsets = [0, 0], sizes = [16, 32], strides = [1, 1]} : vector<16x64xf32> to vector<16x32xf32>
    %34 = vector.extract_strided_slice %32 {offsets = [0, 32], sizes = [16, 32], strides = [1, 1]} : vector<16x64xf32> to vector<16x32xf32>
    %35 = vector.extract_strided_slice %25 {offsets = [0, 128], sizes = [16, 32], strides = [1, 1]} : vector<16x192xf32> to vector<16x32xf32>
    %36 = vector.extract_strided_slice %25 {offsets = [0, 160], sizes = [16, 32], strides = [1, 1]} : vector<16x192xf32> to vector<16x32xf32>
    %c64_11 = arith.constant 64 : index
    %c0_12 = arith.constant 0 : index
    %37 = vector.load %arg1[%c64_11, %c0_12] : memref<114x192xf32, #tpu.memory_space<vmem>>, vector<16x16xf32>
    %38 = arith.truncf %37 : vector<16x16xf32> to vector<16x16xbf16>
    %39 = arith.truncf %36 : vector<16x32xf32> to vector<16x32xbf16>
    %cst_13 = arith.constant dense<0.000000e+00> : vector<16x32xf32>
    %40 = tpu.matmul %38, %39, %cst_13 {dimension_numbers = #tpu.dot_dimension_numbers<[1], [0], [0], [1], [0, 0, 1, 1], [], []>} : vector<16x16xbf16>, vector<16x32xbf16>, vector<16x32xf32> -> vector<16x32xf32>
    %c96 = arith.constant 96 : index
    %c0_14 = arith.constant 0 : index
    %41 = vector.load %arg1[%c96, %c0_14] : memref<114x192xf32, #tpu.memory_space<vmem>>, vector<16x16xf32>
    %42 = arith.truncf %33 : vector<16x32xf32> to vector<16x32xbf16>
    %43 = arith.truncf %34 : vector<16x32xf32> to vector<16x32xbf16>
    %44 = arith.truncf %35 : vector<16x32xf32> to vector<16x32xbf16>
    %45 = vector.extract_strided_slice %42 {offsets = [0, 0], sizes = [16, 8], strides = [1, 1]} : vector<16x32xbf16> to vector<16x8xbf16>
    %46 = vector.extract_strided_slice %43 {offsets = [0, 0], sizes = [16, 8], strides = [1, 1]} : vector<16x32xbf16> to vector<16x8xbf16>
    %cst_15 = arith.constant dense<0.000000e+00> : vector<16x16xf32>
    %47 = tpu.matmul %45, %46, %cst_15 {dimension_numbers = #tpu.dot_dimension_numbers<[1], [1], [0], [0], [0, 0, 1, 0], [], []>} : vector<16x8xbf16>, vector<16x8xbf16>, vector<16x16xf32> -> vector<16x16xf32>
    %48 = arith.addf %47, %41 : vector<16x16xf32>
    %cst_16 = arith.constant dense<0xFF800000> : vector<16xf32>
    %49 = vector.multi_reduction <maximumf>, %48, %cst_16 [1] : vector<16x16xf32> to vector<16xf32>
    %50 = vector.shape_cast %49 : vector<16xf32> to vector<16x1xf32>
    %51 = vector.broadcast %50 : vector<16x1xf32> to vector<16x16xf32>
    %52 = arith.subf %48, %51 : vector<16x16xf32>
    %53 = math.exp %52 : vector<16x16xf32>
    %cst_17 = arith.constant dense<0.000000e+00> : vector<16xf32>
    %54 = vector.multi_reduction <add>, %53, %cst_17 [1] : vector<16x16xf32> to vector<16xf32>
    %55 = vector.shape_cast %54 : vector<16xf32> to vector<16x1xf32>
    %56 = tpu.reciprocal %55 {approx = true} : vector<16x1xf32> -> vector<16x1xf32>
    %57 = vector.broadcast %56 : vector<16x1xf32> to vector<16x16xf32>
    %58 = arith.mulf %53, %57 : vector<16x16xf32>
    %59 = arith.truncf %58 : vector<16x16xf32> to vector<16x16xbf16>
    %60 = vector.extract_strided_slice %44 {offsets = [0, 0], sizes = [16, 8], strides = [1, 1]} : vector<16x32xbf16> to vector<16x8xbf16>
    %cst_18 = arith.constant dense<0.000000e+00> : vector<16x8xf32>
    %61 = tpu.matmul %59, %60, %cst_18 {dimension_numbers = #tpu.dot_dimension_numbers<[1], [0], [0], [1], [0, 0, 1, 1], [], []>} : vector<16x16xbf16>, vector<16x8xbf16>, vector<16x8xf32> -> vector<16x8xf32>
    %62 = vector.extract_strided_slice %42 {offsets = [0, 8], sizes = [16, 8], strides = [1, 1]} : vector<16x32xbf16> to vector<16x8xbf16>
    %63 = vector.extract_strided_slice %43 {offsets = [0, 8], sizes = [16, 8], strides = [1, 1]} : vector<16x32xbf16> to vector<16x8xbf16>
    %cst_19 = arith.constant dense<0.000000e+00> : vector<16x16xf32>
    %64 = tpu.matmul %62, %63, %cst_19 {dimension_numbers = #tpu.dot_dimension_numbers<[1], [1], [0], [0], [0, 0, 1, 0], [], []>} : vector<16x8xbf16>, vector<16x8xbf16>, vector<16x16xf32> -> vector<16x16xf32>
    %65 = arith.addf %64, %41 : vector<16x16xf32>
    %cst_20 = arith.constant dense<0xFF800000> : vector<16xf32>
    %66 = vector.multi_reduction <maximumf>, %65, %cst_20 [1] : vector<16x16xf32> to vector<16xf32>
    %67 = vector.shape_cast %66 : vector<16xf32> to vector<16x1xf32>
    %68 = vector.broadcast %67 : vector<16x1xf32> to vector<16x16xf32>
    %69 = arith.subf %65, %68 : vector<16x16xf32>
    %70 = math.exp %69 : vector<16x16xf32>
    %cst_21 = arith.constant dense<0.000000e+00> : vector<16xf32>
    %71 = vector.multi_reduction <add>, %70, %cst_21 [1] : vector<16x16xf32> to vector<16xf32>
    %72 = vector.shape_cast %71 : vector<16xf32> to vector<16x1xf32>
    %73 = tpu.reciprocal %72 {approx = true} : vector<16x1xf32> -> vector<16x1xf32>
    %74 = vector.broadcast %73 : vector<16x1xf32> to vector<16x16xf32>
    %75 = arith.mulf %70, %74 : vector<16x16xf32>
    %76 = arith.truncf %75 : vector<16x16xf32> to vector<16x16xbf16>
    %77 = vector.extract_strided_slice %44 {offsets = [0, 8], sizes = [16, 8], strides = [1, 1]} : vector<16x32xbf16> to vector<16x8xbf16>
    %cst_22 = arith.constant dense<0.000000e+00> : vector<16x8xf32>
    %78 = tpu.matmul %76, %77, %cst_22 {dimension_numbers = #tpu.dot_dimension_numbers<[1], [0], [0], [1], [0, 0, 1, 1], [], []>} : vector<16x16xbf16>, vector<16x8xbf16>, vector<16x8xf32> -> vector<16x8xf32>
    %79 = vector.extract_strided_slice %42 {offsets = [0, 16], sizes = [16, 8], strides = [1, 1]} : vector<16x32xbf16> to vector<16x8xbf16>
    %80 = vector.extract_strided_slice %43 {offsets = [0, 16], sizes = [16, 8], strides = [1, 1]} : vector<16x32xbf16> to vector<16x8xbf16>
    %cst_23 = arith.constant dense<0.000000e+00> : vector<16x16xf32>
    %81 = tpu.matmul %79, %80, %cst_23 {dimension_numbers = #tpu.dot_dimension_numbers<[1], [1], [0], [0], [0, 0, 1, 0], [], []>} : vector<16x8xbf16>, vector<16x8xbf16>, vector<16x16xf32> -> vector<16x16xf32>
    %82 = arith.addf %81, %41 : vector<16x16xf32>
    %cst_24 = arith.constant dense<0xFF800000> : vector<16xf32>
    %83 = vector.multi_reduction <maximumf>, %82, %cst_24 [1] : vector<16x16xf32> to vector<16xf32>
    %84 = vector.shape_cast %83 : vector<16xf32> to vector<16x1xf32>
    %85 = vector.broadcast %84 : vector<16x1xf32> to vector<16x16xf32>
    %86 = arith.subf %82, %85 : vector<16x16xf32>
    %87 = math.exp %86 : vector<16x16xf32>
    %cst_25 = arith.constant dense<0.000000e+00> : vector<16xf32>
    %88 = vector.multi_reduction <add>, %87, %cst_25 [1] : vector<16x16xf32> to vector<16xf32>
    %89 = vector.shape_cast %88 : vector<16xf32> to vector<16x1xf32>
    %90 = tpu.reciprocal %89 {approx = true} : vector<16x1xf32> -> vector<16x1xf32>
    %91 = vector.broadcast %90 : vector<16x1xf32> to vector<16x16xf32>
    %92 = arith.mulf %87, %91 : vector<16x16xf32>
    %93 = arith.truncf %92 : vector<16x16xf32> to vector<16x16xbf16>
    %94 = vector.extract_strided_slice %44 {offsets = [0, 16], sizes = [16, 8], strides = [1, 1]} : vector<16x32xbf16> to vector<16x8xbf16>
    %cst_26 = arith.constant dense<0.000000e+00> : vector<16x8xf32>
    %95 = tpu.matmul %93, %94, %cst_26 {dimension_numbers = #tpu.dot_dimension_numbers<[1], [0], [0], [1], [0, 0, 1, 1], [], []>} : vector<16x16xbf16>, vector<16x8xbf16>, vector<16x8xf32> -> vector<16x8xf32>
    %96 = vector.extract_strided_slice %42 {offsets = [0, 24], sizes = [16, 8], strides = [1, 1]} : vector<16x32xbf16> to vector<16x8xbf16>
    %97 = vector.extract_strided_slice %43 {offsets = [0, 24], sizes = [16, 8], strides = [1, 1]} : vector<16x32xbf16> to vector<16x8xbf16>
    %cst_27 = arith.constant dense<0.000000e+00> : vector<16x16xf32>
    %98 = tpu.matmul %96, %97, %cst_27 {dimension_numbers = #tpu.dot_dimension_numbers<[1], [1], [0], [0], [0, 0, 1, 0], [], []>} : vector<16x8xbf16>, vector<16x8xbf16>, vector<16x16xf32> -> vector<16x16xf32>
    %99 = arith.addf %98, %41 : vector<16x16xf32>
    %cst_28 = arith.constant dense<0xFF800000> : vector<16xf32>
    %100 = vector.multi_reduction <maximumf>, %99, %cst_28 [1] : vector<16x16xf32> to vector<16xf32>
    %101 = vector.shape_cast %100 : vector<16xf32> to vector<16x1xf32>
    %102 = vector.broadcast %101 : vector<16x1xf32> to vector<16x16xf32>
    %103 = arith.subf %99, %102 : vector<16x16xf32>
    %104 = math.exp %103 : vector<16x16xf32>
    %cst_29 = arith.constant dense<0.000000e+00> : vector<16xf32>
    %105 = vector.multi_reduction <add>, %104, %cst_29 [1] : vector<16x16xf32> to vector<16xf32>
    %106 = vector.shape_cast %105 : vector<16xf32> to vector<16x1xf32>
    %107 = tpu.reciprocal %106 {approx = true} : vector<16x1xf32> -> vector<16x1xf32>
    %108 = vector.broadcast %107 : vector<16x1xf32> to vector<16x16xf32>
    %109 = arith.mulf %104, %108 : vector<16x16xf32>
    %110 = arith.truncf %109 : vector<16x16xf32> to vector<16x16xbf16>
    %111 = vector.extract_strided_slice %44 {offsets = [0, 24], sizes = [16, 8], strides = [1, 1]} : vector<16x32xbf16> to vector<16x8xbf16>
    %cst_30 = arith.constant dense<0.000000e+00> : vector<16x8xf32>
    %112 = tpu.matmul %110, %111, %cst_30 {dimension_numbers = #tpu.dot_dimension_numbers<[1], [0], [0], [1], [0, 0, 1, 1], [], []>} : vector<16x16xbf16>, vector<16x8xbf16>, vector<16x8xf32> -> vector<16x8xf32>
    %113 = tpu.concatenate %61, %78, %95, %112 in 1 : vector<16x8xf32>, vector<16x8xf32>, vector<16x8xf32>, vector<16x8xf32> -> vector<16x32xf32>
    %114 = arith.truncf %113 : vector<16x32xf32> to vector<16x32xbf16>
    %c32 = arith.constant 32 : index
    %c0_31 = arith.constant 0 : index
    %115 = vector.load %arg1[%c32, %c0_31] : memref<114x192xf32, #tpu.memory_space<vmem>>, vector<32x32xf32>
    %116 = arith.truncf %115 : vector<32x32xf32> to vector<32x32xbf16>
    %cst_32 = arith.constant dense<0.000000e+00> : vector<16x32xf32>
    %117 = tpu.matmul %114, %116, %cst_32 {dimension_numbers = #tpu.dot_dimension_numbers<[1], [0], [0], [1], [0, 0, 1, 1], [], []>} : vector<16x32xbf16>, vector<32x32xbf16>, vector<16x32xf32> -> vector<16x32xf32>
    %118 = arith.addf %40, %117 : vector<16x32xf32>
    %c113 = arith.constant 113 : index
    %c0_33 = arith.constant 0 : index
    %119 = vector.load %arg1[%c113, %c0_33] : memref<114x192xf32, #tpu.memory_space<vmem>>, vector<1x32xf32>
    %120 = vector.broadcast %119 : vector<1x32xf32> to vector<16x32xf32>
    %121 = arith.addf %118, %120 : vector<16x32xf32>
    %c0_34 = arith.constant 0 : index
    %c0_35 = arith.constant 0 : index
    %122 = vector.load %arg2[%c0_34, %c0_35] : memref<16x32xf32, #tpu.memory_space<vmem>>, vector<16x32xf32>
    tpu.vector_store %arg2[%c0_34, %c0_35], %121 {strides = array<i32>} : memref<16x32xf32, #tpu.memory_space<vmem>>, vector<16x32xf32>,
    return
  }
}

</mosaic_0001>

<llo_original>
// kernel: hybrid_attention_forward.1
$region0: #{hybrid_attention_forward.1}
  #allocation0 [shape = 'u32[]', space=smem, size = 0x4, offset = 0x4, fixed_abs, tag = 'smem constant byte address 0x4 - core index']
  #allocation1 [shape = 'u32[144,128]{1,0:T(1,128)}', space=vmem, size = 0x12000, scoped, tag = 'internal scratch']
  %s0 = inlined_call_operand.vmem [shape: f32[16,32], index: 0, kind: input, shape index: {}]
  %s1 = inlined_call_operand.vmem [shape: f32[114,192], index: 1, kind: input, shape index: {}]
  %s2 = inlined_call_operand.hbm [shape: f32[16,32], index: 2, kind: output, shape index: {}]
  %s3 = sld [smem:[#allocation0]]
  $region18: #{hybrid_attention_forward.1} parent=0
    _
  %s5 = ssub.s32 1, %s3
  %s6 = scalar_select 0, %s5, %s3
  $region1: #{hybrid_attention_forward.1} parent=0
    #allocation2 [shape = 'u8[8192]{0}', space=vmem, size = 0x2000, scoped, tag = 'output window, operand 0, single buffered']
    #allocation3 [shape = 's32[1]{0}', space=sflag, size = 0x4, scoped, tag = 'scoped memory for hybrid_attention_forward.1']
    %7 = vsyncpa [#allocation3], 0
    // Predicated region
    $region2: #{hybrid_attention_forward.1} parent=1 // pred_check
      _
    $region3: #{hybrid_attention_forward.1} parent=1 // pred_check_branch
      %9 = sbr.rel (0) target = $region5
    $region4: #{hybrid_attention_forward.1} parent=1 // pred_region
      _
    $region5: #{hybrid_attention_forward.1} parent=1 // pred_fallthru
      _
    // Predicated region
    $region6: #{hybrid_attention_forward.1} parent=1 // pred_check
      _
    $region7: #{hybrid_attention_forward.1} parent=1 // pred_check_branch
      %11 = sbr.rel (0) target = $region9
    $region8: #{hybrid_attention_forward.1} parent=1 // pred_region
      _
    $region9: #{hybrid_attention_forward.1} parent=1 // pred_fallthru
      _
    %v13 = vld [vmem:[%s0] sm:$0xff]
    %v14 = vld [vmem:[%s0 + $0x8] sm:$0xff]
    %vm15 = vcmask 261120
    %v16 = vsel %vm15, %v13, 0.0
    %17 = vadd.xlane.f32.xlu0 %v16
    %v18 = vpop.xlane.xlu0 %17
    %v19 = vsel %vm15, %v14, 0.0
    %20 = vadd.xlane.f32.xlu0 %v19
    %v21 = vpop.xlane.xlu0 %20
    %v22 = vrcp.pop 32.0
    %v23 = vmul.f32 %v18, %v22
    %v24 = vmul.f32 %v21, %v22
    %v25 = vsub.f32 %v13, %v23
    %v26 = vsub.f32 %v14, %v24
    %v27 = vmul.f32 %v25, %v25
    %v28 = vmul.f32 %v26, %v26
    %v29 = vsel %vm15, %v27, 0.0
    %30 = vadd.xlane.f32.xlu0 %v29
    %v31 = vpop.xlane.xlu0 %30
    %v32 = vsel %vm15, %v28, 0.0
    %33 = vadd.xlane.f32.xlu0 %v32
    %v34 = vpop.xlane.xlu0 %33
    %v35 = vmul.f32 %v31, %v22
    %v36 = vmul.f32 %v34, %v22
    %v37 = vadd.f32 %v35, 1e-05
    %v38 = vadd.f32 %v36, 1e-05
    %v39 = vrsqrt.pop %v37
    %v40 = vrsqrt.pop %v38
    %v41 = vmul.f32 %v25, %v39
    %v42 = vmul.f32 %v26, %v40
    %v43 = vld [vmem:[%s1] sm:$0xff]
    %v44 = vld [vmem:[%s1 + $0x8] sm:$0xff]
    %v45 = vld [vmem:[%s1 + $0x10] sm:$0xff]
    %v46 = vld [vmem:[%s1 + $0x18] sm:$0xff]
    %v47 = vld [vmem:[%s1 + $0x20] sm:$0xff]
    %v48 = vld [vmem:[%s1 + $0x28] sm:$0xff]
    %v49 = vld [vmem:[%s1 + $0x30] sm:$0xff]
    %v50 = vld [vmem:[%s1 + $0x38] sm:$0xff]
    %v51 = vpack.c.bf16 %v45, %v43
    %v52 = vpack.c.bf16 %v46, %v44
    %v53 = vpack.c.bf16 %v49, %v47
    %v54 = vpack.c.bf16 %v50, %v48
    %v55 = vpack.c.bf16 %v42, %v41
    %s56 = scalar_lea.vmem %s1, 224
    %v57 = vld [vmem:[%s56] ss:$8 sm:$0x3]
    %v59 = vlaneseq
    %v60 = vshrl.u32 %v59, 7
    %v61 = vsub.s32 0, %v60
    %v62 = vrot.slane %v57, %v61
    %v63 = vlaneseq
    %v64 = vshrl.u32 %v63, 7
    %v65 = vsub.s32 1, %v64
    %v66 = vrot.slane %v57, %v65
    %v70 = vsel %vm15, %v55, 0
    %72 = vmatprep.subr.bf16.mxu0 %v52
    %73 = vmatpush1.bf16.msra.mxu0 %v51
    %74 = vmatprep.subr.bf16.mxu0 %v54
    %75 = vmatpush1.bf16.msra.mxu0 %v53
    %76 = vmatprep.subr.bf16.mxu0 0
    %77 = vmatpush1.bf16.msra.mxu0 0
    %78 = vmatprep.subr.bf16.mxu0 0
    %79 = vmatpush1.bf16.msra.mxu0 0
    %80 = vmatprep.subr.bf16.mxu0 0
    %81 = vmatpush1.bf16.msra.mxu0 0
    %82 = vmatprep.subr.bf16.mxu0 0
    %83 = vmatpush1.bf16.msra.mxu0 0
    %84 = vmatprep.subr.bf16.mxu0 0
    %85 = vmatpush1.bf16.msra.mxu0 0
    %86 = vmatprep.subr.bf16.mxu0 0
    %87 = vmatpush1.bf16.msra.mxu0 0
    %88 = vmatprep.subr.bf16.mxu0 0
    %89 = vmatpush1.bf16.msra.mxu0 0
    %90 = vmatprep.subr.bf16.mxu0 0
    %91 = vmatpush1.bf16.msra.mxu0 0
    %92 = vmatprep.subr.bf16.mxu0 0
    %93 = vmatpush1.bf16.msra.mxu0 0
    %94 = vmatprep.subr.bf16.mxu0 0
    %95 = vmatpush1.bf16.msra.mxu0 0
    %96 = vmatprep.subr.bf16.mxu0 0
    %97 = vmatpush1.bf16.msra.mxu0 0
    %98 = vmatprep.subr.bf16.mxu0 0
    %99 = vmatpush1.bf16.msra.mxu0 0
    %100 = vmatprep.subr.bf16.mxu0 0
    %101 = vmatpush1.bf16.msra.mxu0 0
    %102 = vmatprep.subr.bf16.mxu0 0
    %103 = vmatpush1.bf16.msra.mxu0 0
    %104 = vmatprep.mubr.bf16.mxu0 0
    %105 = vmatmul.mubr.bf16.gmra.mrb[0].mxu0 %v70
    %v106 = vpop.f32.mrb[0].mxu0
    %v107 = vadd.f32 %v62, %v106
    %v108 = vpop.f32.mrb[0].mxu0
    %v109 = vadd.f32 %v66, %v108
    %v110 = vpop.f32.mrb[0].mxu0
    %v111 = vadd.f32 %v62, %v110
    %v112 = vpop.f32.mrb[0].mxu0
    %v113 = vadd.f32 %v66, %v112
    %114 = vdwg.mxu0
    %v115 = vld [vmem:[%s1 + $0xa0] sm:$0xff]
    %v116 = vld [vmem:[%s1 + $0xb0] sm:$0xff]
    %v117 = vmul.f32 %v107, %v115
    %v118 = vmul.f32 %v111, %v116
    %121 = vrot.lane.b32.xlu0 %v117, 64
    %v122 = vpop.permute.xlu0 %121
    %123 = vrot.lane.b32.xlu0 %v118, 64
    %v124 = vpop.permute.xlu0 %123
    %v127 = vadd.f32 %v117, %v122
    %v128 = vadd.f32 %v118, %v124
    %v129 = vld [vmem:[%s1 + $0x80] sm:$0xff]
    %v130 = vld [vmem:[%s1 + $0x90] sm:$0xff]
    %v131 = vpack.c.bf16 %v130, %v129
    %v132 = vpack.c.bf16 %v113, %v109
    %v133 = vld [vmem:[%s1 + $0xc0] sm:$0xff]
    %v134 = vld [vmem:[%s1 + $0xd0] sm:$0xff]
    %v135 = vpack.c.bf16 %v128, %v127
    %137 = vrot.lane.b32.xlu0 %v135, 96
    %v138 = vpop.permute.xlu0 %137
    %vm139 = vcmask 64512
    %v141 = vsel %vm139, %v135, 0
    %v144 = vsel %vm139, %v138, 0
    %146 = vmatprep.subr.bf16.mxu0 0
    %147 = vmatpush1.bf16.xpose.msra.mxu0 %v144
    %148 = vmatprep.subr.bf16.mxu0 0
    %149 = vmatpush1.bf16.xpose.msra.mxu0 0
    %150 = vmatprep.subr.bf16.mxu0 0
    %151 = vmatpush1.bf16.xpose.msra.mxu0 0
    %152 = vmatprep.subr.bf16.mxu0 0
    %153 = vmatpush1.bf16.xpose.msra.mxu0 0
    %154 = vmatprep.subr.bf16.mxu0 0
    %155 = vmatpush1.bf16.xpose.msra.mxu0 0
    %156 = vmatprep.subr.bf16.mxu0 0
    %157 = vmatpush1.bf16.xpose.msra.mxu0 0
    %158 = vmatprep.subr.bf16.mxu0 0
    %159 = vmatpush1.bf16.xpose.msra.mxu0 0
    %160 = vmatprep.subr.bf16.mxu0 0
    %161 = vmatpush1.bf16.xpose.msra.mxu0 0
    %162 = vmatprep.subr.bf16.mxu0 0
    %163 = vmatpush1.bf16.xpose.msra.mxu0 0
    %164 = vmatprep.subr.bf16.mxu0 0
    %165 = vmatpush1.bf16.xpose.msra.mxu0 0
    %166 = vmatprep.subr.bf16.mxu0 0
    %167 = vmatpush1.bf16.xpose.msra.mxu0 0
    %168 = vmatprep.subr.bf16.mxu0 0
    %169 = vmatpush1.bf16.xpose.msra.mxu0 0
    %170 = vmatprep.subr.bf16.mxu0 0
    %171 = vmatpush1.bf16.xpose.msra.mxu0 0
    %172 = vmatprep.subr.bf16.mxu0 0
    %173 = vmatpush1.bf16.xpose.msra.mxu0 0
    %174 = vmatprep.subr.bf16.mxu0 0
    %175 = vmatpush1.bf16.xpose.msra.mxu0 0
    %176 = vmatprep.subr.bf16.mxu0 0
    %177 = vmatpush1.bf16.xpose.msra.mxu0 0
    %178 = vmatprep.mubr.bf16.mxu0 0
    %179 = vmatmul.mubr.bf16.gmra.mrb[0].mxu0 %v141
    %v180 = vpop.f32.mrb[0].mxu0
    %v181 = vadd.f32 %v133, %v180
    %v182 = vpop.f32.mrb[0].mxu0
    %v183 = vpop.f32.mrb[0].mxu0
    %v184 = vadd.f32 %v134, %v183
    %v185 = vpop.f32.mrb[0].mxu0
    %186 = vdwg.mxu0
    %vm187 = vcmask 130048
    %v188 = vsel %vm187, %v181, -inf
    %189 = vmax.xlane.f32.xlu0 %v188
    %v190 = vpop.xlane.xlu0 %189
    %v191 = vsel %vm187, %v184, -inf
    %192 = vmax.xlane.f32.xlu0 %v191
    %v193 = vpop.xlane.xlu0 %192
    %v194 = vsub.f32 %v181, %v190
    %v195 = vsub.f32 %v184, %v193
    %v196 = vmul.f32 %v194, 1.442695
    %v197 = vpow.pop %v196
    %v198 = vmul.f32 %v195, 1.442695
    %v199 = vpow.pop %v198
    %v200 = vsel %vm187, %v197, 0.0
    %201 = vadd.xlane.f32.xlu0 %v200
    %v202 = vpop.xlane.xlu0 %201
    %v203 = vsel %vm187, %v199, 0.0
    %204 = vadd.xlane.f32.xlu0 %v203
    %v205 = vpop.xlane.xlu0 %204
    %v206 = vrcp.pop %v202
    %v207 = vrcp.pop %v205
    %v208 = vmul.f32 %v197, %v206
    %v209 = vmul.f32 %v199, %v207
    %v210 = vpack.c.bf16 %v209, %v208
    %v212 = vsel %vm187, %v210, 0
    %214 = vmatprep.subr.bf16.mxu0 0
    %215 = vmatpush1.bf16.msra.mxu0 %v132
    %216 = vmatprep.subr.bf16.mxu0 0
    %217 = vmatpush1.bf16.msra.mxu0 0
    %218 = vmatprep.subr.bf16.mxu0 0
    %219 = vmatpush1.bf16.msra.mxu0 0
    %220 = vmatprep.subr.bf16.mxu0 0
    %221 = vmatpush1.bf16.msra.mxu0 0
    %222 = vmatprep.subr.bf16.mxu0 0
    %223 = vmatpush1.bf16.msra.mxu0 0
    %224 = vmatprep.subr.bf16.mxu0 0
    %225 = vmatpush1.bf16.msra.mxu0 0
    %226 = vmatprep.subr.bf16.mxu0 0
    %227 = vmatpush1.bf16.msra.mxu0 0
    %228 = vmatprep.subr.bf16.mxu0 0
    %229 = vmatpush1.bf16.msra.mxu0 0
    %230 = vmatprep.subr.bf16.mxu0 0
    %231 = vmatpush1.bf16.msra.mxu0 0
    %232 = vmatprep.subr.bf16.mxu0 0
    %233 = vmatpush1.bf16.msra.mxu0 0
    %234 = vmatprep.subr.bf16.mxu0 0
    %235 = vmatpush1.bf16.msra.mxu0 0
    %236 = vmatprep.subr.bf16.mxu0 0
    %237 = vmatpush1.bf16.msra.mxu0 0
    %238 = vmatprep.subr.bf16.mxu0 0
    %239 = vmatpush1.bf16.msra.mxu0 0
    %240 = vmatprep.subr.bf16.mxu0 0
    %241 = vmatpush1.bf16.msra.mxu0 0
    %242 = vmatprep.subr.bf16.mxu0 0
    %243 = vmatpush1.bf16.msra.mxu0 0
    %244 = vmatprep.subr.bf16.mxu0 0
    %245 = vmatpush1.bf16.msra.mxu0 0
    %246 = vmatprep.mubr.bf16.mxu0 0
    %247 = vmatmul.mubr.bf16.gmra.mrb[0].mxu0 %v212
    %v248 = vpop.f32.mrb[0].mxu0
    %v249 = vadd.f32 0.0, %v248
    %v250 = vpop.f32.mrb[0].mxu0
    %v251 = vpop.f32.mrb[0].mxu0
    %v252 = vadd.f32 0.0, %v251
    %v253 = vpop.f32.mrb[0].mxu0
    %254 = vdwg.mxu0
    %255 = vrot.lane.b32.xlu0 %v135, 120
    %v256 = vpop.permute.xlu0 %255
    %257 = vrot.lane.b32.xlu0 %v135, 88
    %v258 = vpop.permute.xlu0 %257
    %v260 = vsel %vm139, %v256, 0
    %v263 = vsel %vm139, %v258, 0
    %265 = vmatprep.subr.bf16.mxu0 0
    %266 = vmatpush1.bf16.xpose.msra.mxu0 %v263
    %267 = vmatprep.subr.bf16.mxu0 0
    %268 = vmatpush1.bf16.xpose.msra.mxu0 0
    %269 = vmatprep.subr.bf16.mxu0 0
    %270 = vmatpush1.bf16.xpose.msra.mxu0 0
    %271 = vmatprep.subr.bf16.mxu0 0
    %272 = vmatpush1.bf16.xpose.msra.mxu0 0
    %273 = vmatprep.subr.bf16.mxu0 0
    %274 = vmatpush1.bf16.xpose.msra.mxu0 0
    %275 = vmatprep.subr.bf16.mxu0 0
    %276 = vmatpush1.bf16.xpose.msra.mxu0 0
    %277 = vmatprep.subr.bf16.mxu0 0
    %278 = vmatpush1.bf16.xpose.msra.mxu0 0
    %279 = vmatprep.subr.bf16.mxu0 0
    %280 = vmatpush1.bf16.xpose.msra.mxu0 0
    %281 = vmatprep.subr.bf16.mxu0 0
    %282 = vmatpush1.bf16.xpose.msra.mxu0 0
    %283 = vmatprep.subr.bf16.mxu0 0
    %284 = vmatpush1.bf16.xpose.msra.mxu0 0
    %285 = vmatprep.subr.bf16.mxu0 0
    %286 = vmatpush1.bf16.xpose.msra.mxu0 0
    %287 = vmatprep.subr.bf16.mxu0 0
    %288 = vmatpush1.bf16.xpose.msra.mxu0 0
    %289 = vmatprep.subr.bf16.mxu0 0
    %290 = vmatpush1.bf16.xpose.msra.mxu0 0
    %291 = vmatprep.subr.bf16.mxu0 0
    %292 = vmatpush1.bf16.xpose.msra.mxu0 0
    %293 = vmatprep.subr.bf16.mxu0 0
    %294 = vmatpush1.bf16.xpose.msra.mxu0 0
    %295 = vmatprep.subr.bf16.mxu0 0
    %296 = vmatpush1.bf16.xpose.msra.mxu0 0
    %297 = vmatprep.mubr.bf16.mxu0 0
    %298 = vmatmul.mubr.bf16.gmra.mrb[0].mxu0 %v260
    %v299 = vpop.f32.mrb[0].mxu0
    %v300 = vadd.f32 %v133, %v299
    %v301 = vpop.f32.mrb[0].mxu0
    %v302 = vpop.f32.mrb[0].mxu0
    %v303 = vadd.f32 %v134, %v302
    %v304 = vpop.f32.mrb[0].mxu0
    %305 = vdwg.mxu0
    %v306 = vsel %vm187, %v300, -inf
    %307 = vmax.xlane.f32.xlu0 %v306
    %v308 = vpop.xlane.xlu0 %307
    %v309 = vsel %vm187, %v303, -inf
    %310 = vmax.xlane.f32.xlu0 %v309
    %v311 = vpop.xlane.xlu0 %310
    %v312 = vsub.f32 %v300, %v308
    %v313 = vsub.f32 %v303, %v311
    %v314 = vmul.f32 %v312, 1.442695
    %v315 = vpow.pop %v314
    %v316 = vmul.f32 %v313, 1.442695
    %v317 = vpow.pop %v316
    %v318 = vsel %vm187, %v315, 0.0
    %319 = vadd.xlane.f32.xlu0 %v318
    %v320 = vpop.xlane.xlu0 %319
    %v321 = vsel %vm187, %v317, 0.0
    %322 = vadd.xlane.f32.xlu0 %v321
    %v323 = vpop.xlane.xlu0 %322
    %v324 = vrcp.pop %v320
    %v325 = vrcp.pop %v323
    %v326 = vmul.f32 %v315, %v324
    %v327 = vmul.f32 %v317, %v325
    %v328 = vpack.c.bf16 %v327, %v326
    %330 = vrot.lane.b32.xlu0 %v132, 120
    %v331 = vpop.permute.xlu0 %330
    %v334 = vsel %vm187, %v328, 0
    %336 = vmatprep.subr.bf16.mxu0 0
    %337 = vmatpush1.bf16.msra.mxu0 %v331
    %338 = vmatprep.subr.bf16.mxu0 0
    %339 = vmatpush1.bf16.msra.mxu0 0
    %340 = vmatprep.subr.bf16.mxu0 0
    %341 = vmatpush1.bf16.msra.mxu0 0
    %342 = vmatprep.subr.bf16.mxu0 0
    %343 = vmatpush1.bf16.msra.mxu0 0
    %344 = vmatprep.subr.bf16.mxu0 0
    %345 = vmatpush1.bf16.msra.mxu0 0
    %346 = vmatprep.subr.bf16.mxu0 0
    %347 = vmatpush1.bf16.msra.mxu0 0
    %348 = vmatprep.subr.bf16.mxu0 0
    %349 = vmatpush1.bf16.msra.mxu0 0
    %350 = vmatprep.subr.bf16.mxu0 0
    %351 = vmatpush1.bf16.msra.mxu0 0
    %352 = vmatprep.subr.bf16.mxu0 0
    %353 = vmatpush1.bf16.msra.mxu0 0
    %354 = vmatprep.subr.bf16.mxu0 0
    %355 = vmatpush1.bf16.msra.mxu0 0
    %356 = vmatprep.subr.bf16.mxu0 0
    %357 = vmatpush1.bf16.msra.mxu0 0
    %358 = vmatprep.subr.bf16.mxu0 0
    %359 = vmatpush1.bf16.msra.mxu0 0
    %360 = vmatprep.subr.bf16.mxu0 0
    %361 = vmatpush1.bf16.msra.mxu0 0
    %362 = vmatprep.subr.bf16.mxu0 0
    %363 = vmatpush1.bf16.msra.mxu0 0
    %364 = vmatprep.subr.bf16.mxu0 0
    %365 = vmatpush1.bf16.msra.mxu0 0
    %366 = vmatprep.subr.bf16.mxu0 0
    %367 = vmatpush1.bf16.msra.mxu0 0
    %368 = vmatprep.mubr.bf16.mxu0 0
    %369 = vmatmul.mubr.bf16.gmra.mrb[0].mxu0 %v334
    %v370 = vpop.f32.mrb[0].mxu0
    %v371 = vadd.f32 0.0, %v370
    %v372 = vpop.f32.mrb[0].mxu0
    %v373 = vpop.f32.mrb[0].mxu0
    %v374 = vadd.f32 0.0, %v373
    %v375 = vpop.f32.mrb[0].mxu0
    %376 = vdwg.mxu0
    %377 = vrot.lane.b32.xlu0 %v135, 112
    %v378 = vpop.permute.xlu0 %377
    %379 = vrot.lane.b32.xlu0 %v135, 80
    %v380 = vpop.permute.xlu0 %379
    %v382 = vsel %vm139, %v378, 0
    %v385 = vsel %vm139, %v380, 0
    %387 = vmatprep.subr.bf16.mxu0 0
    %388 = vmatpush1.bf16.xpose.msra.mxu0 %v385
    %389 = vmatprep.subr.bf16.mxu0 0
    %390 = vmatpush1.bf16.xpose.msra.mxu0 0
    %391 = vmatprep.subr.bf16.mxu0 0
    %392 = vmatpush1.bf16.xpose.msra.mxu0 0
    %393 = vmatprep.subr.bf16.mxu0 0
    %394 = vmatpush1.bf16.xpose.msra.mxu0 0
    %395 = vmatprep.subr.bf16.mxu0 0
    %396 = vmatpush1.bf16.xpose.msra.mxu0 0
    %397 = vmatprep.subr.bf16.mxu0 0
    %398 = vmatpush1.bf16.xpose.msra.mxu0 0
    %399 = vmatprep.subr.bf16.mxu0 0
    %400 = vmatpush1.bf16.xpose.msra.mxu0 0
    %401 = vmatprep.subr.bf16.mxu0 0
    %402 = vmatpush1.bf16.xpose.msra.mxu0 0
    %403 = vmatprep.subr.bf16.mxu0 0
    %404 = vmatpush1.bf16.xpose.msra.mxu0 0
    %405 = vmatprep.subr.bf16.mxu0 0
    %406 = vmatpush1.bf16.xpose.msra.mxu0 0
    %407 = vmatprep.subr.bf16.mxu0 0
    %408 = vmatpush1.bf16.xpose.msra.mxu0 0
    %409 = vmatprep.subr.bf16.mxu0 0
    %410 = vmatpush1.bf16.xpose.msra.mxu0 0
    %411 = vmatprep.subr.bf16.mxu0 0
    %412 = vmatpush1.bf16.xpose.msra.mxu0 0
    %413 = vmatprep.subr.bf16.mxu0 0
    %414 = vmatpush1.bf16.xpose.msra.mxu0 0
    %415 = vmatprep.subr.bf16.mxu0 0
    %416 = vmatpush1.bf16.xpose.msra.mxu0 0
    %417 = vmatprep.subr.bf16.mxu0 0
    %418 = vmatpush1.bf16.xpose.msra.mxu0 0
    %419 = vmatprep.mubr.bf16.mxu0 0
    %420 = vmatmul.mubr.bf16.gmra.mrb[0].mxu0 %v382
    %v421 = vpop.f32.mrb[0].mxu0
    %v422 = vadd.f32 %v133, %v421
    %v423 = vpop.f32.mrb[0].mxu0
    %v424 = vpop.f32.mrb[0].mxu0
    %v425 = vadd.f32 %v134, %v424
    %v426 = vpop.f32.mrb[0].mxu0
    %427 = vdwg.mxu0
    %v428 = vsel %vm187, %v422, -inf
    %429 = vmax.xlane.f32.xlu0 %v428
    %v430 = vpop.xlane.xlu0 %429
    %v431 = vsel %vm187, %v425, -inf
    %432 = vmax.xlane.f32.xlu0 %v431
    %v433 = vpop.xlane.xlu0 %432
    %v434 = vsub.f32 %v422, %v430
    %v435 = vsub.f32 %v425, %v433
    %v436 = vmul.f32 %v434, 1.442695
    %v437 = vpow.pop %v436
    %v438 = vmul.f32 %v435, 1.442695
    %v439 = vpow.pop %v438
    %v440 = vsel %vm187, %v437, 0.0
    %441 = vadd.xlane.f32.xlu0 %v440
    %v442 = vpop.xlane.xlu0 %441
    %v443 = vsel %vm187, %v439, 0.0
    %444 = vadd.xlane.f32.xlu0 %v443
    %v445 = vpop.xlane.xlu0 %444
    %v446 = vrcp.pop %v442
    %v447 = vrcp.pop %v445
    %v448 = vmul.f32 %v437, %v446
    %v449 = vmul.f32 %v439, %v447
    %v450 = vpack.c.bf16 %v449, %v448
    %451 = vrot.lane.b32.xlu0 %v132, 112
    %v452 = vpop.permute.xlu0 %451
    %v455 = vsel %vm187, %v450, 0
    %457 = vmatprep.subr.bf16.mxu0 0
    %458 = vmatpush1.bf16.msra.mxu0 %v452
    %459 = vmatprep.subr.bf16.mxu0 0
    %460 = vmatpush1.bf16.msra.mxu0 0
    %461 = vmatprep.subr.bf16.mxu0 0
    %462 = vmatpush1.bf16.msra.mxu0 0
    %463 = vmatprep.subr.bf16.mxu0 0
    %464 = vmatpush1.bf16.msra.mxu0 0
    %465 = vmatprep.subr.bf16.mxu0 0
    %466 = vmatpush1.bf16.msra.mxu0 0
    %467 = vmatprep.subr.bf16.mxu0 0
    %468 = vmatpush1.bf16.msra.mxu0 0
    %469 = vmatprep.subr.bf16.mxu0 0
    %470 = vmatpush1.bf16.msra.mxu0 0
    %471 = vmatprep.subr.bf16.mxu0 0
    %472 = vmatpush1.bf16.msra.mxu0 0
    %473 = vmatprep.subr.bf16.mxu0 0
    %474 = vmatpush1.bf16.msra.mxu0 0
    %475 = vmatprep.subr.bf16.mxu0 0
    %476 = vmatpush1.bf16.msra.mxu0 0
    %477 = vmatprep.subr.bf16.mxu0 0
    %478 = vmatpush1.bf16.msra.mxu0 0
    %479 = vmatprep.subr.bf16.mxu0 0
    %480 = vmatpush1.bf16.msra.mxu0 0
    %481 = vmatprep.subr.bf16.mxu0 0
    %482 = vmatpush1.bf16.msra.mxu0 0
    %483 = vmatprep.subr.bf16.mxu0 0
    %484 = vmatpush1.bf16.msra.mxu0 0
    %485 = vmatprep.subr.bf16.mxu0 0
    %486 = vmatpush1.bf16.msra.mxu0 0
    %487 = vmatprep.subr.bf16.mxu0 0
    %488 = vmatpush1.bf16.msra.mxu0 0
    %489 = vmatprep.mubr.bf16.mxu0 0
    %490 = vmatmul.mubr.bf16.gmra.mrb[0].mxu0 %v455
    %v491 = vpop.f32.mrb[0].mxu0
    %v492 = vadd.f32 0.0, %v491
    %v493 = vpop.f32.mrb[0].mxu0
    %v494 = vpop.f32.mrb[0].mxu0
    %v495 = vadd.f32 0.0, %v494
    %v496 = vpop.f32.mrb[0].mxu0
    %497 = vdwg.mxu0
    %498 = vrot.lane.b32.xlu0 %v135, 104
    %v499 = vpop.permute.xlu0 %498
    %500 = vrot.lane.b32.xlu0 %v135, 72
    %v501 = vpop.permute.xlu0 %500
    %v503 = vsel %vm139, %v499, 0
    %v506 = vsel %vm139, %v501, 0
    %508 = vmatprep.subr.bf16.mxu0 0
    %509 = vmatpush1.bf16.xpose.msra.mxu0 %v506
    %510 = vmatprep.subr.bf16.mxu0 0
    %511 = vmatpush1.bf16.xpose.msra.mxu0 0
    %512 = vmatprep.subr.bf16.mxu0 0
    %513 = vmatpush1.bf16.xpose.msra.mxu0 0
    %514 = vmatprep.subr.bf16.mxu0 0
    %515 = vmatpush1.bf16.xpose.msra.mxu0 0
    %516 = vmatprep.subr.bf16.mxu0 0
    %517 = vmatpush1.bf16.xpose.msra.mxu0 0
    %518 = vmatprep.subr.bf16.mxu0 0
    %519 = vmatpush1.bf16.xpose.msra.mxu0 0
    %520 = vmatprep.subr.bf16.mxu0 0
    %521 = vmatpush1.bf16.xpose.msra.mxu0 0
    %522 = vmatprep.subr.bf16.mxu0 0
    %523 = vmatpush1.bf16.xpose.msra.mxu0 0
    %524 = vmatprep.subr.bf16.mxu0 0
    %525 = vmatpush1.bf16.xpose.msra.mxu0 0
    %526 = vmatprep.subr.bf16.mxu0 0
    %527 = vmatpush1.bf16.xpose.msra.mxu0 0
    %528 = vmatprep.subr.bf16.mxu0 0
    %529 = vmatpush1.bf16.xpose.msra.mxu0 0
    %530 = vmatprep.subr.bf16.mxu0 0
    %531 = vmatpush1.bf16.xpose.msra.mxu0 0
    %532 = vmatprep.subr.bf16.mxu0 0
    %533 = vmatpush1.bf16.xpose.msra.mxu0 0
    %534 = vmatprep.subr.bf16.mxu0 0
    %535 = vmatpush1.bf16.xpose.msra.mxu0 0
    %536 = vmatprep.subr.bf16.mxu0 0
    %537 = vmatpush1.bf16.xpose.msra.mxu0 0
    %538 = vmatprep.subr.bf16.mxu0 0
    %539 = vmatpush1.bf16.xpose.msra.mxu0 0
    %540 = vmatprep.mubr.bf16.mxu0 0
    %541 = vmatmul.mubr.bf16.gmra.mrb[0].mxu0 %v503
    %v542 = vpop.f32.mrb[0].mxu0
    %v543 = vadd.f32 %v133, %v542
    %v544 = vpop.f32.mrb[0].mxu0
    %v545 = vpop.f32.mrb[0].mxu0
    %v546 = vadd.f32 %v134, %v545
    %v547 = vpop.f32.mrb[0].mxu0
    %548 = vdwg.mxu0
    %v549 = vsel %vm187, %v543, -inf
    %550 = vmax.xlane.f32.xlu0 %v549
    %v551 = vpop.xlane.xlu0 %550
    %v552 = vsel %vm187, %v546, -inf
    %553 = vmax.xlane.f32.xlu0 %v552
    %v554 = vpop.xlane.xlu0 %553
    %v555 = vsub.f32 %v543, %v551
    %v556 = vsub.f32 %v546, %v554
    %v557 = vmul.f32 %v555, 1.442695
    %v558 = vpow.pop %v557
    %v559 = vmul.f32 %v556, 1.442695
    %v560 = vpow.pop %v559
    %v561 = vsel %vm187, %v558, 0.0
    %562 = vadd.xlane.f32.xlu0 %v561
    %v563 = vpop.xlane.xlu0 %562
    %v564 = vsel %vm187, %v560, 0.0
    %565 = vadd.xlane.f32.xlu0 %v564
    %v566 = vpop.xlane.xlu0 %565
    %v567 = vrcp.pop %v563
    %v568 = vrcp.pop %v566
    %v569 = vmul.f32 %v558, %v567
    %v570 = vmul.f32 %v560, %v568
    %v571 = vpack.c.bf16 %v570, %v569
    %572 = vrot.lane.b32.xlu0 %v132, 104
    %v573 = vpop.permute.xlu0 %572
    %v576 = vsel %vm187, %v571, 0
    %578 = vmatprep.subr.bf16.mxu0 0
    %579 = vmatpush1.bf16.msra.mxu0 %v573
    %580 = vmatprep.subr.bf16.mxu0 0
    %581 = vmatpush1.bf16.msra.mxu0 0
    %582 = vmatprep.subr.bf16.mxu0 0
    %583 = vmatpush1.bf16.msra.mxu0 0
    %584 = vmatprep.subr.bf16.mxu0 0
    %585 = vmatpush1.bf16.msra.mxu0 0
    %586 = vmatprep.subr.bf16.mxu0 0
    %587 = vmatpush1.bf16.msra.mxu0 0
    %588 = vmatprep.subr.bf16.mxu0 0
    %589 = vmatpush1.bf16.msra.mxu0 0
    %590 = vmatprep.subr.bf16.mxu0 0
    %591 = vmatpush1.bf16.msra.mxu0 0
    %592 = vmatprep.subr.bf16.mxu0 0
    %593 = vmatpush1.bf16.msra.mxu0 0
    %594 = vmatprep.subr.bf16.mxu0 0
    %595 = vmatpush1.bf16.msra.mxu0 0
    %596 = vmatprep.subr.bf16.mxu0 0
    %597 = vmatpush1.bf16.msra.mxu0 0
    %598 = vmatprep.subr.bf16.mxu0 0
    %599 = vmatpush1.bf16.msra.mxu0 0
    %600 = vmatprep.subr.bf16.mxu0 0
    %601 = vmatpush1.bf16.msra.mxu0 0
    %602 = vmatprep.subr.bf16.mxu0 0
    %603 = vmatpush1.bf16.msra.mxu0 0
    %604 = vmatprep.subr.bf16.mxu0 0
    %605 = vmatpush1.bf16.msra.mxu0 0
    %606 = vmatprep.subr.bf16.mxu0 0
    %607 = vmatpush1.bf16.msra.mxu0 0
    %608 = vmatprep.subr.bf16.mxu0 0
    %609 = vmatpush1.bf16.msra.mxu0 0
    %610 = vmatprep.mubr.bf16.mxu0 0
    %611 = vmatmul.mubr.bf16.gmra.mrb[0].mxu0 %v576
    %v612 = vpop.f32.mrb[0].mxu0
    %v613 = vadd.f32 0.0, %v612
    %v614 = vpop.f32.mrb[0].mxu0
    %v615 = vpop.f32.mrb[0].mxu0
    %v616 = vadd.f32 0.0, %v615
    %v617 = vpop.f32.mrb[0].mxu0
    %618 = vdwg.mxu0
    %621 = vrot.lane.b32.xlu0 %v371, 8
    %v622 = vpop.permute.xlu0 %621
    %623 = vrot.lane.b32.xlu0 %v374, 8
    %v624 = vpop.permute.xlu0 %623
    %629 = vrot.lane.b32.xlu0 %v492, 16
    %v630 = vpop.permute.xlu0 %629
    %631 = vrot.lane.b32.xlu0 %v495, 16
    %v632 = vpop.permute.xlu0 %631
    %637 = vrot.lane.b32.xlu0 %v613, 24
    %v638 = vpop.permute.xlu0 %637
    %639 = vrot.lane.b32.xlu0 %v616, 24
    %v640 = vpop.permute.xlu0 %639
    %v643 = vsel %vm139, %v249, %v622
    %v644 = vsel %vm139, %v252, %v624
    %v645 = vsel %vm187, %v643, %v630
    %v646 = vsel %vm187, %v644, %v632
    %vm647 = vcmask 195584
    %v648 = vsel %vm647, %v645, %v638
    %v649 = vsel %vm647, %v646, %v640
    %v650 = vpack.c.bf16 %v649, %v648
    %v651 = vld [vmem:[%s1 + $0x40] sm:$0xff]
    %v652 = vld [vmem:[%s1 + $0x50] sm:$0xff]
    %v653 = vld [vmem:[%s1 + $0x60] sm:$0xff]
    %v654 = vld [vmem:[%s1 + $0x70] sm:$0xff]
    %v655 = vpack.c.bf16 %v652, %v651
    %v656 = vpack.c.bf16 %v654, %v653
    %v658 = vsel %vm15, %v650, 0
    %660 = vmatprep.subr.bf16.mxu0 0
    %661 = vmatpush1.bf16.msra.mxu0 %v655
    %662 = vmatprep.subr.bf16.mxu0 0
    %663 = vmatpush1.bf16.msra.mxu0 %v656
    %664 = vmatprep.subr.bf16.mxu0 0
    %665 = vmatpush1.bf16.msra.mxu0 0
    %666 = vmatprep.subr.bf16.mxu0 0
    %667 = vmatpush1.bf16.msra.mxu0 0
    %668 = vmatprep.subr.bf16.mxu0 0
    %669 = vmatpush1.bf16.msra.mxu0 0
    %670 = vmatprep.subr.bf16.mxu0 0
    %671 = vmatpush1.bf16.msra.mxu0 0
    %672 = vmatprep.subr.bf16.mxu0 0
    %673 = vmatpush1.bf16.msra.mxu0 0
    %674 = vmatprep.subr.bf16.mxu0 0
    %675 = vmatpush1.bf16.msra.mxu0 0
    %676 = vmatprep.subr.bf16.mxu0 0
    %677 = vmatpush1.bf16.msra.mxu0 0
    %678 = vmatprep.subr.bf16.mxu0 0
    %679 = vmatpush1.bf16.msra.mxu0 0
    %680 = vmatprep.subr.bf16.mxu0 0
    %681 = vmatpush1.bf16.msra.mxu0 0
    %682 = vmatprep.subr.bf16.mxu0 0
    %683 = vmatpush1.bf16.msra.mxu0 0
    %684 = vmatprep.subr.bf16.mxu0 0
    %685 = vmatpush1.bf16.msra.mxu0 0
    %686 = vmatprep.subr.bf16.mxu0 0
    %687 = vmatpush1.bf16.msra.mxu0 0
    %688 = vmatprep.subr.bf16.mxu0 0
    %689 = vmatpush1.bf16.msra.mxu0 0
    %690 = vmatprep.subr.bf16.mxu0 0
    %691 = vmatpush1.bf16.msra.mxu0 0
    %692 = vmatprep.mubr.bf16.mxu0 0
    %693 = vmatmul.mubr.bf16.gmra.mrb[0].mxu0 %v658
    %v694 = vpop.f32.mrb[0].mxu0
    %v695 = vadd.f32 0.0, %v694
    %v696 = vpop.f32.mrb[0].mxu0
    %v697 = vpop.f32.mrb[0].mxu0
    %v698 = vadd.f32 0.0, %v697
    %v699 = vpop.f32.mrb[0].mxu0
    %700 = vdwg.mxu0
    %701 = vrot.lane.b32.xlu0 %v132, 96
    %v702 = vpop.permute.xlu0 %701
    %v705 = vsel %vm187, %v131, 0
    %707 = vmatprep.subr.bf16.mxu0 0
    %708 = vmatpush1.bf16.msra.mxu0 %v702
    %709 = vmatprep.subr.bf16.mxu0 0
    %710 = vmatpush1.bf16.msra.mxu0 0
    %711 = vmatprep.subr.bf16.mxu0 0
    %712 = vmatpush1.bf16.msra.mxu0 0
    %713 = vmatprep.subr.bf16.mxu0 0
    %714 = vmatpush1.bf16.msra.mxu0 0
    %715 = vmatprep.subr.bf16.mxu0 0
    %716 = vmatpush1.bf16.msra.mxu0 0
    %717 = vmatprep.subr.bf16.mxu0 0
    %718 = vmatpush1.bf16.msra.mxu0 0
    %719 = vmatprep.subr.bf16.mxu0 0
    %720 = vmatpush1.bf16.msra.mxu0 0
    %721 = vmatprep.subr.bf16.mxu0 0
    %722 = vmatpush1.bf16.msra.mxu0 0
    %723 = vmatprep.subr.bf16.mxu0 0
    %724 = vmatpush1.bf16.msra.mxu0 0
    %725 = vmatprep.subr.bf16.mxu0 0
    %726 = vmatpush1.bf16.msra.mxu0 0
    %727 = vmatprep.subr.bf16.mxu0 0
    %728 = vmatpush1.bf16.msra.mxu0 0
    %729 = vmatprep.subr.bf16.mxu0 0
    %730 = vmatpush1.bf16.msra.mxu0 0
    %731 = vmatprep.subr.bf16.mxu0 0
    %732 = vmatpush1.bf16.msra.mxu0 0
    %733 = vmatprep.subr.bf16.mxu0 0
    %734 = vmatpush1.bf16.msra.mxu0 0
    %735 = vmatprep.subr.bf16.mxu0 0
    %736 = vmatpush1.bf16.msra.mxu0 0
    %737 = vmatprep.subr.bf16.mxu0 0
    %738 = vmatpush1.bf16.msra.mxu0 0
    %739 = vmatprep.mubr.bf16.mxu0 0
    %740 = vmatmul.mubr.bf16.gmra.mrb[0].mxu0 %v705
    %v741 = vpop.f32.mrb[0].mxu0
    %v742 = vadd.f32 %v695, %v741
    %v743 = vpop.f32.mrb[0].mxu0
    %v744 = vpop.f32.mrb[0].mxu0
    %v745 = vadd.f32 %v698, %v744
    %v746 = vpop.f32.mrb[0].mxu0
    %747 = vdwg.mxu0
    %v748 = vld [vmem:[%s1 + $0xe1] ss:$0 sm:$0xff]
    %v749 = vadd.f32 %v742, %v748
    %v750 = vadd.f32 %v745, %v748
    %751 = vst.msk [vmem:[#allocation2] sm:$0xff] %vm15, %v749
    %752 = vst.msk [vmem:[#allocation2 + $0x8] sm:$0xff] %vm15, %v750
    // Predicated region
    $region10: #{hybrid_attention_forward.1} parent=1 // pred_check
      _
    $region11: #{hybrid_attention_forward.1} parent=1 // pred_check_branch
      %754 = sbr.rel (0) target = $region13
    $region12: #{hybrid_attention_forward.1} parent=1 // pred_region
      %s756 = ssub.s32 256, 256
      %757 = vsyncadd [#allocation3], %s756
      %s758 = sshll.u32 [#allocation2], 4
      %s759 = int_to_ptr.vmem [resolvable:$true] %s758
      %764 = dma.vmem_to_hbm [thread:$0]  %s759, 256, %s2, [#allocation3], 128, 128, 8
    $region13: #{hybrid_attention_forward.1} parent=1 // pred_fallthru
      _
    // Predicated region
    $region14: #{hybrid_attention_forward.1} parent=1 // pred_check
      _
    $region15: #{hybrid_attention_forward.1} parent=1 // pred_check_branch
      %766 = sbr.rel (0) target = $region17
    $region16: #{hybrid_attention_forward.1} parent=1 // pred_region
      %767 = dma.done [#allocation3], 256
    $region17: #{hybrid_attention_forward.1} parent=1 // pred_fallthru
      _
    %768 = vsyncpa [#allocation3], 1

</llo_original>
